<compile_context>
chip_gen: v6e
topology: v6e:2x2x1
jax: 0.10.0
libtpu: 0.0.40
codegen_flags: <defaults>
</compile_context>

<pallas_src>
import jax
import jax.numpy as jnp
from jax.experimental import pallas as pl
from jax.experimental.pallas import tpu as pltpu


def _predictor_kernel(x_ref, w_ref, b_ref, out_ref):
    # x_ref:  (TN, HW, C)    w_ref: (C, OUT)    b_ref: (1, OUT)    out_ref: (TN, OUT)
    hw = x_ref.shape[1]
    inv_hw = jnp.float32(1.0 / hw)
    # AdaptiveAvgPool2d(1): mean over the spatial (second-minor) axis with f32
    # accumulation, keeping the loaded tile in its native dtype.
    pooled = jnp.sum(x_ref[...], axis=1, dtype=jnp.float32) * inv_hw          # (TN, C)
    # Fused cls_score + bbox_pred linear layers: one MXU contraction + bias.
    out = jnp.dot(pooled, w_ref[...].astype(jnp.float32),
                  preferred_element_type=jnp.float32) + b_ref[...]
    out_ref[...] = out.astype(out_ref.dtype)


def _choose_row_tile(n, c, hw, itemsize, x_budget_bytes=16 * 1024 * 1024):
    """Largest sublane-aligned N-tile whose double-buffered x slab fits the budget.

    Budget (16 MiB for 2x the input tile) keeps total VMEM well under the 32 MiB
    scoped limit, which is safe on v5e/v6e (128 MiB phys) and v7x (64 MiB phys).
    """
    per_row = max(1, c * hw * itemsize)
    tn = x_budget_bytes // (2 * per_row)          # 2x: BlockSpec double-buffering
    tn = max(8, (tn // 8) * 8)                    # sublane multiple
    tn = min(tn, 1024)                            # per-step overhead already amortized
    n_pad8 = ((n + 7) // 8) * 8
    return min(tn, n_pad8)


@jax.jit
def fast_rcnn_predictor(x_nchw, w_cls, b_cls, w_bbox, b_bbox):
    """x_nchw: (N, C, H, W). Weights in PyTorch Linear layout: (out, in)."""
    N, C, H, W = x_nchw.shape
    HW = H * W
    num_classes = w_cls.shape[0]
    bbox_out = w_bbox.shape[0]
    out_total = num_classes + bbox_out

    # Layout glue: NCHW -> (N, HW, C) so C is the lane axis inside the kernel.
    x_nlc = jnp.transpose(x_nchw, (0, 2, 3, 1)).reshape(N, HW, C)

    # Fuse the two Linear layers into a single lane-dense matmul.
    w_fused = jnp.concatenate([w_cls.T, w_bbox.T], axis=1)                    # (C, OUT)
    b_fused = jnp.concatenate([b_cls, b_bbox]).reshape(1, out_total).astype(jnp.float32)

    itemsize = jnp.dtype(x_nchw.dtype).itemsize
    tn = _choose_row_tile(N, C, HW, itemsize)
    n_pad = ((N + tn - 1) // tn) * tn
    if n_pad != N:
        x_nlc = jnp.pad(x_nlc, ((0, n_pad - N), (0, 0), (0, 0)))

    grid = (n_pad // tn,)

    cost = pl.CostEstimate(
        flops=2 * N * C * out_total + N * HW * C,
        transcendentals=0,
        bytes_accessed=(N * HW * C * itemsize            # dominant: x read
                        + C * out_total * 4 + out_total * 4
                        + N * out_total * itemsize),
    )

    fused_out = pl.pallas_call(
        _predictor_kernel,
        out_shape=jax.ShapeDtypeStruct((n_pad, out_total), x_nchw.dtype),
        grid=grid,
        in_specs=[
            pl.BlockSpec((tn, HW, C), lambda i: (i, 0, 0)),          # tiled over N
            pl.BlockSpec((C, out_total), lambda i: (0, 0)),          # resident weights
            pl.BlockSpec((1, out_total), lambda i: (0, 0)),          # resident bias
        ],
        out_specs=pl.BlockSpec((tn, out_total), lambda i: (i, 0)),
        compiler_params=pltpu.CompilerParams(
            dimension_semantics=("parallel",),    # v7x: shard N-tiles across both TCs
            vmem_limit_bytes=32 * 1024 * 1024,    # explicit, safe on v5e/v6e/v7x
        ),
        cost_estimate=cost,
    )(x_nlc, w_fused, b_fused)

    cls_logit = fused_out[:N, :num_classes]
    bbox_pred = fused_out[:N, num_classes:]
    return cls_logit, bbox_pred


if __name__ == "__main__":
    # Small synthetic config: in_channels=4, NUM_CLASSES=8, CLS_AGNOSTIC_BBOX_REG=False
    N, C, H, W = 2, 4, 16, 16
    num_classes = 8
    num_bbox_reg_classes = num_classes            # not class-agnostic
    bbox_out = num_bbox_reg_classes * 4

    key = jax.random.PRNGKey(0)
    kx, kwc, kwb = jax.random.split(key, 3)

    x = jax.random.normal(kx, (N, C, H, W), dtype=jnp.float32)

    # Deterministic param init mirroring nn.init in __init__:
    w_cls = 0.01 * jax.random.normal(kwc, (num_classes, C), dtype=jnp.float32)
    b_cls = jnp.zeros((num_classes,), dtype=jnp.float32)
    w_bbox = 0.001 * jax.random.normal(kwb, (bbox_out, C), dtype=jnp.float32)
    b_bbox = jnp.zeros((bbox_out,), dtype=jnp.float32)

    cls_logit, bbox_pred = fast_rcnn_predictor(x, w_cls, b_cls, w_bbox, b_bbox)
    jax.block_until_ready((cls_logit, bbox_pred))

    # Sanity check against a plain-JAX reference of the PyTorch forward.
    pooled_ref = jnp.mean(x, axis=(2, 3))
    cls_ref = pooled_ref @ w_cls.T + b_cls
    bbox_ref = pooled_ref @ w_bbox.T + b_bbox
    assert cls_logit.shape == (N, num_classes) and bbox_pred.shape == (N, bbox_out)
    assert jnp.allclose(cls_logit, cls_ref, atol=1e-5)
    assert jnp.allclose(bbox_pred, bbox_ref, atol=1e-5)

    print("KERNEL_OK")
</pallas_src>

<mosaic_0001>
module attributes {stable_mosaic.version = 11 : i64} {
  func.func @_predictor_kernel(%arg0: i32, %arg1: memref<8x256x4xf32, #tpu.memory_space<vmem>>, %arg2: memref<4x40xf32, #tpu.memory_space<vmem>>, %arg3: memref<1x40xf32, #tpu.memory_space<vmem>>, %arg4: memref<8x40xf32, #tpu.memory_space<vmem>>) attributes {dimension_semantics = [#tpu.dimension_semantics<parallel>], iteration_bounds = array<i64: 1>, scalar_prefetch = 0 : i64, scratch_operands = 0 : i64, tpu.core_type = #tpu.core_type<tc>, window_params = [{transform_indices = @transform_0, window_bounds = array<i64: 8, 256, 4>}, {pipeline_mode = #tpu.pipeline_mode<synchronous>, transform_indices = @transform_1, window_bounds = array<i64: 4, 40>}, {pipeline_mode = #tpu.pipeline_mode<synchronous>, transform_indices = @transform_2, window_bounds = array<i64: 1, 40>}, {transform_indices = @transform_3, window_bounds = array<i64: 8, 40>}]} {
    %c0 = arith.constant 0 : index
    %c0_0 = arith.constant 0 : index
    %c0_1 = arith.constant 0 : index
    %0 = vector.load %arg1[%c0, %c0_0, %c0_1] : memref<8x256x4xf32, #tpu.memory_space<vmem>>, vector<8x256x4xf32>
    %cst = arith.constant dense<0.000000e+00> : vector<8x4xf32>
    %1 = vector.multi_reduction <add>, %0, %cst [1] : vector<8x256x4xf32> to vector<8x4xf32>
    %cst_2 = arith.constant 3.906250e-03 : f32
    %2 = vector.broadcast %cst_2 : f32 to vector<8x4xf32>
    %3 = arith.mulf %1, %2 : vector<8x4xf32>
    %c0_3 = arith.constant 0 : index
    %c0_4 = arith.constant 0 : index
    %4 = vector.load %arg2[%c0_3, %c0_4] : memref<4x40xf32, #tpu.memory_space<vmem>>, vector<4x40xf32>
    %cst_5 = arith.constant dense<0.000000e+00> : vector<8x40xf32>
    %5 = tpu.matmul %3, %4, %cst_5 {dimension_numbers = #tpu.dot_dimension_numbers<[1], [0], [0], [1], [0, 0, 1, 1], [], []>} : vector<8x4xf32>, vector<4x40xf32>, vector<8x40xf32> -> vector<8x40xf32>
    %c0_6 = arith.constant 0 : index
    %c0_7 = arith.constant 0 : index
    %6 = vector.load %arg3[%c0_6, %c0_7] : memref<1x40xf32, #tpu.memory_space<vmem>>, vector<1x40xf32>
    %7 = vector.broadcast %6 : vector<1x40xf32> to vector<8x40xf32>
    %8 = arith.addf %5, %7 : vector<8x40xf32>
    %c0_8 = arith.constant 0 : index
    %c0_9 = arith.constant 0 : index
    %9 = vector.load %arg4[%c0_8, %c0_9] : memref<8x40xf32, #tpu.memory_space<vmem>>, vector<8x40xf32>
    tpu.vector_store %arg4[%c0_8, %c0_9], %8 {strides = array<i32>} : memref<8x40xf32, #tpu.memory_space<vmem>>, vector<8x40xf32>,
    return
  }
  func.func @transform_0(%arg0: i32) -> (i32, i32, i32) {
    %c0_i32 = arith.constant 0 : i32
    %c0_i32_0 = arith.constant 0 : i32
    %c0_i32_1 = arith.constant 0 : i32
    return %arg0, %c0_i32, %c0_i32_0 : i32, i32, i32
  }
  func.func @transform_1(%arg0: i32) -> (i32, i32) {
    %c0_i32 = arith.constant 0 : i32
    %c0_i32_0 = arith.constant 0 : i32
    %c0_i32_1 = arith.constant 0 : i32
    return %c0_i32, %c0_i32_0 : i32, i32
  }
  func.func @transform_2(%arg0: i32) -> (i32, i32) {
    %c0_i32 = arith.constant 0 : i32
    %c0_i32_0 = arith.constant 0 : i32
    %c0_i32_1 = arith.constant 0 : i32
    return %c0_i32, %c0_i32_0 : i32, i32
  }
  func.func @transform_3(%arg0: i32) -> (i32, i32) {
    %c0_i32 = arith.constant 0 : i32
    %c0_i32_0 = arith.constant 0 : i32
    return %arg0, %c0_i32 : i32, i32
  }
}

</mosaic_0001>

<llo_original>
// kernel: fast_rcnn_predictor.1
$region0: #{fast_rcnn_predictor.1}
  #allocation0 [shape = 'u32[]', space=smem, size = 0x4, offset = 0x4, fixed_abs, tag = 'smem constant byte address 0x4 - core index']
  #allocation1 [shape = 'u32[144,128]{1,0:T(1,128)}', space=vmem, size = 0x12000, scoped, tag = 'internal scratch']
  %s0 = inlined_call_operand.vmem [shape: f32[8,256,4], index: 0, kind: input, shape index: {}]
  %s1 = inlined_call_operand.vmem [shape: f32[4,40], index: 1, kind: input, shape index: {}]
  %s2 = inlined_call_operand.vmem [shape: f32[1,40], index: 2, kind: input, shape index: {}]
  %s3 = inlined_call_operand.vmem [shape: f32[8,40], index: 3, kind: output, shape index: {}]
  %s4 = sld [smem:[#allocation0]]
  $region22: #{fast_rcnn_predictor.1} parent=0
    _
  %s6 = ssub.s32 1, %s4
  %s7 = scalar_select 0, %s6, %s4
  // Predicated region
  $region2: #{fast_rcnn_predictor.1} parent=0 // pred_check
    _
  $region3: #{fast_rcnn_predictor.1} parent=0 // pred_check_branch
    %9 = sbr.rel (0) target = $region5
  $region4: #{fast_rcnn_predictor.1} parent=0 // pred_region
    _
  $region5: #{fast_rcnn_predictor.1} parent=0 // pred_fallthru
    _
  // Predicated region
  $region6: #{fast_rcnn_predictor.1} parent=0 // pred_check
    _
  $region7: #{fast_rcnn_predictor.1} parent=0 // pred_check_branch
    %11 = sbr.rel (0) target = $region9
  $region8: #{fast_rcnn_predictor.1} parent=0 // pred_region
    _
  $region9: #{fast_rcnn_predictor.1} parent=0 // pred_fallthru
    _
  // Predicated region
  $region10: #{fast_rcnn_predictor.1} parent=0 // pred_check
    _
  $region11: #{fast_rcnn_predictor.1} parent=0 // pred_check_branch
    %13 = sbr.rel (0) target = $region13
  $region12: #{fast_rcnn_predictor.1} parent=0 // pred_region
    _
  $region13: #{fast_rcnn_predictor.1} parent=0 // pred_fallthru
    _
  %v14 = vld [vmem:[%s0] sm:$0xff]
  %v15 = vld [vmem:[%s0 + $0x8] sm:$0xff]
  %v16 = vld [vmem:[%s0 + $0x10] sm:$0xff]
  %v17 = vld [vmem:[%s0 + $0x18] sm:$0xff]
  %v18 = vld [vmem:[%s0 + $0x20] sm:$0xff]
  %v19 = vld [vmem:[%s0 + $0x28] sm:$0xff]
  %v20 = vld [vmem:[%s0 + $0x30] sm:$0xff]
  %v21 = vld [vmem:[%s0 + $0x38] sm:$0xff]
  %v22 = vld [vmem:[%s0 + $0x40] sm:$0xff]
  %v23 = vld [vmem:[%s0 + $0x48] sm:$0xff]
  %v24 = vld [vmem:[%s0 + $0x50] sm:$0xff]
  %v25 = vld [vmem:[%s0 + $0x58] sm:$0xff]
  %v26 = vld [vmem:[%s0 + $0x60] sm:$0xff]
  %v27 = vld [vmem:[%s0 + $0x68] sm:$0xff]
  %v28 = vld [vmem:[%s0 + $0x70] sm:$0xff]
  %v29 = vld [vmem:[%s0 + $0x78] sm:$0xff]
  %v30 = vld [vmem:[%s0 + $0x80] sm:$0xff]
  %v31 = vld [vmem:[%s0 + $0x88] sm:$0xff]
  %v32 = vld [vmem:[%s0 + $0x90] sm:$0xff]
  %v33 = vld [vmem:[%s0 + $0x98] sm:$0xff]
  %v34 = vld [vmem:[%s0 + $0xa0] sm:$0xff]
  %v35 = vld [vmem:[%s0 + $0xa8] sm:$0xff]
  %v36 = vld [vmem:[%s0 + $0xb0] sm:$0xff]
  %v37 = vld [vmem:[%s0 + $0xb8] sm:$0xff]
  %v38 = vld [vmem:[%s0 + $0xc0] sm:$0xff]
  %v39 = vld [vmem:[%s0 + $0xc8] sm:$0xff]
  %v40 = vld [vmem:[%s0 + $0xd0] sm:$0xff]
  %v41 = vld [vmem:[%s0 + $0xd8] sm:$0xff]
  %v42 = vld [vmem:[%s0 + $0xe0] sm:$0xff]
  %v43 = vld [vmem:[%s0 + $0xe8] sm:$0xff]
  %v44 = vld [vmem:[%s0 + $0xf0] sm:$0xff]
  %v45 = vld [vmem:[%s0 + $0xf8] sm:$0xff]
  %v46 = vld [vmem:[%s0 + $0x100] sm:$0xff]
  %v47 = vld [vmem:[%s0 + $0x108] sm:$0xff]
  %v48 = vld [vmem:[%s0 + $0x110] sm:$0xff]
  %v49 = vld [vmem:[%s0 + $0x118] sm:$0xff]
  %v50 = vld [vmem:[%s0 + $0x120] sm:$0xff]
  %v51 = vld [vmem:[%s0 + $0x128] sm:$0xff]
  %v52 = vld [vmem:[%s0 + $0x130] sm:$0xff]
  %v53 = vld [vmem:[%s0 + $0x138] sm:$0xff]
  %v54 = vld [vmem:[%s0 + $0x140] sm:$0xff]
  %v55 = vld [vmem:[%s0 + $0x148] sm:$0xff]
  %v56 = vld [vmem:[%s0 + $0x150] sm:$0xff]
  %v57 = vld [vmem:[%s0 + $0x158] sm:$0xff]
  %v58 = vld [vmem:[%s0 + $0x160] sm:$0xff]
  %v59 = vld [vmem:[%s0 + $0x168] sm:$0xff]
  %v60 = vld [vmem:[%s0 + $0x170] sm:$0xff]
  %v61 = vld [vmem:[%s0 + $0x178] sm:$0xff]
  %v62 = vld [vmem:[%s0 + $0x180] sm:$0xff]
  %v63 = vld [vmem:[%s0 + $0x188] sm:$0xff]
  %v64 = vld [vmem:[%s0 + $0x190] sm:$0xff]
  %v65 = vld [vmem:[%s0 + $0x198] sm:$0xff]
  %v66 = vld [vmem:[%s0 + $0x1a0] sm:$0xff]
  %v67 = vld [vmem:[%s0 + $0x1a8] sm:$0xff]
  %v68 = vld [vmem:[%s0 + $0x1b0] sm:$0xff]
  %v69 = vld [vmem:[%s0 + $0x1b8] sm:$0xff]
  %v70 = vld [vmem:[%s0 + $0x1c0] sm:$0xff]
  %v71 = vld [vmem:[%s0 + $0x1c8] sm:$0xff]
  %v72 = vld [vmem:[%s0 + $0x1d0] sm:$0xff]
  %v73 = vld [vmem:[%s0 + $0x1d8] sm:$0xff]
  %v74 = vld [vmem:[%s0 + $0x1e0] sm:$0xff]
  %v75 = vld [vmem:[%s0 + $0x1e8] sm:$0xff]
  %v76 = vld [vmem:[%s0 + $0x1f0] sm:$0xff]
  %v77 = vld [vmem:[%s0 + $0x1f8] sm:$0xff]
  %v78 = vld [vmem:[%s0 + $0x200] sm:$0xff]
  %v79 = vld [vmem:[%s0 + $0x208] sm:$0xff]
  %v80 = vld [vmem:[%s0 + $0x210] sm:$0xff]
  %v81 = vld [vmem:[%s0 + $0x218] sm:$0xff]
  %v82 = vld [vmem:[%s0 + $0x220] sm:$0xff]
  %v83 = vld [vmem:[%s0 + $0x228] sm:$0xff]
  %v84 = vld [vmem:[%s0 + $0x230] sm:$0xff]
  %v85 = vld [vmem:[%s0 + $0x238] sm:$0xff]
  %v86 = vld [vmem:[%s0 + $0x240] sm:$0xff]
  %v87 = vld [vmem:[%s0 + $0x248] sm:$0xff]
  %v88 = vld [vmem:[%s0 + $0x250] sm:$0xff]
  %v89 = vld [vmem:[%s0 + $0x258] sm:$0xff]
  %v90 = vld [vmem:[%s0 + $0x260] sm:$0xff]
  %v91 = vld [vmem:[%s0 + $0x268] sm:$0xff]
  %v92 = vld [vmem:[%s0 + $0x270] sm:$0xff]
  %v93 = vld [vmem:[%s0 + $0x278] sm:$0xff]
  %v94 = vld [vmem:[%s0 + $0x280] sm:$0xff]
  %v95 = vld [vmem:[%s0 + $0x288] sm:$0xff]
  %v96 = vld [vmem:[%s0 + $0x290] sm:$0xff]
  %v97 = vld [vmem:[%s0 + $0x298] sm:$0xff]
  %v98 = vld [vmem:[%s0 + $0x2a0] sm:$0xff]
  %v99 = vld [vmem:[%s0 + $0x2a8] sm:$0xff]
  %v100 = vld [vmem:[%s0 + $0x2b0] sm:$0xff]
  %v101 = vld [vmem:[%s0 + $0x2b8] sm:$0xff]
  %v102 = vld [vmem:[%s0 + $0x2c0] sm:$0xff]
  %v103 = vld [vmem:[%s0 + $0x2c8] sm:$0xff]
  %v104 = vld [vmem:[%s0 + $0x2d0] sm:$0xff]
  %v105 = vld [vmem:[%s0 + $0x2d8] sm:$0xff]
  %v106 = vld [vmem:[%s0 + $0x2e0] sm:$0xff]
  %v107 = vld [vmem:[%s0 + $0x2e8] sm:$0xff]
  %v108 = vld [vmem:[%s0 + $0x2f0] sm:$0xff]
  %v109 = vld [vmem:[%s0 + $0x2f8] sm:$0xff]
  %v110 = vld [vmem:[%s0 + $0x300] sm:$0xff]
  %v111 = vld [vmem:[%s0 + $0x308] sm:$0xff]
  %v112 = vld [vmem:[%s0 + $0x310] sm:$0xff]
  %v113 = vld [vmem:[%s0 + $0x318] sm:$0xff]
  %v114 = vld [vmem:[%s0 + $0x320] sm:$0xff]
  %v115 = vld [vmem:[%s0 + $0x328] sm:$0xff]
  %v116 = vld [vmem:[%s0 + $0x330] sm:$0xff]
  %v117 = vld [vmem:[%s0 + $0x338] sm:$0xff]
  %v118 = vld [vmem:[%s0 + $0x340] sm:$0xff]
  %v119 = vld [vmem:[%s0 + $0x348] sm:$0xff]
  %v120 = vld [vmem:[%s0 + $0x350] sm:$0xff]
  %v121 = vld [vmem:[%s0 + $0x358] sm:$0xff]
  %v122 = vld [vmem:[%s0 + $0x360] sm:$0xff]
  %v123 = vld [vmem:[%s0 + $0x368] sm:$0xff]
  %v124 = vld [vmem:[%s0 + $0x370] sm:$0xff]
  %v125 = vld [vmem:[%s0 + $0x378] sm:$0xff]
  %v126 = vld [vmem:[%s0 + $0x380] sm:$0xff]
  %v127 = vld [vmem:[%s0 + $0x388] sm:$0xff]
  %v128 = vld [vmem:[%s0 + $0x390] sm:$0xff]
  %v129 = vld [vmem:[%s0 + $0x398] sm:$0xff]
  %v130 = vld [vmem:[%s0 + $0x3a0] sm:$0xff]
  %v131 = vld [vmem:[%s0 + $0x3a8] sm:$0xff]
  %v132 = vld [vmem:[%s0 + $0x3b0] sm:$0xff]
  %v133 = vld [vmem:[%s0 + $0x3b8] sm:$0xff]
  %v134 = vld [vmem:[%s0 + $0x3c0] sm:$0xff]
  %v135 = vld [vmem:[%s0 + $0x3c8] sm:$0xff]
  %v136 = vld [vmem:[%s0 + $0x3d0] sm:$0xff]
  %v137 = vld [vmem:[%s0 + $0x3d8] sm:$0xff]
  %v138 = vld [vmem:[%s0 + $0x3e0] sm:$0xff]
  %v139 = vld [vmem:[%s0 + $0x3e8] sm:$0xff]
  %v140 = vld [vmem:[%s0 + $0x3f0] sm:$0xff]
  %v141 = vld [vmem:[%s0 + $0x3f8] sm:$0xff]
  %v142 = vld [vmem:[%s0 + $0x400] sm:$0xff]
  %v143 = vld [vmem:[%s0 + $0x408] sm:$0xff]
  %v144 = vld [vmem:[%s0 + $0x410] sm:$0xff]
  %v145 = vld [vmem:[%s0 + $0x418] sm:$0xff]
  %v146 = vld [vmem:[%s0 + $0x420] sm:$0xff]
  %v147 = vld [vmem:[%s0 + $0x428] sm:$0xff]
  %v148 = vld [vmem:[%s0 + $0x430] sm:$0xff]
  %v149 = vld [vmem:[%s0 + $0x438] sm:$0xff]
  %v150 = vld [vmem:[%s0 + $0x440] sm:$0xff]
  %v151 = vld [vmem:[%s0 + $0x448] sm:$0xff]
  %v152 = vld [vmem:[%s0 + $0x450] sm:$0xff]
  %v153 = vld [vmem:[%s0 + $0x458] sm:$0xff]
  %v154 = vld [vmem:[%s0 + $0x460] sm:$0xff]
  %v155 = vld [vmem:[%s0 + $0x468] sm:$0xff]
  %v156 = vld [vmem:[%s0 + $0x470] sm:$0xff]
  %v157 = vld [vmem:[%s0 + $0x478] sm:$0xff]
  %v158 = vld [vmem:[%s0 + $0x480] sm:$0xff]
  %v159 = vld [vmem:[%s0 + $0x488] sm:$0xff]
  %v160 = vld [vmem:[%s0 + $0x490] sm:$0xff]
  %v161 = vld [vmem:[%s0 + $0x498] sm:$0xff]
  %v162 = vld [vmem:[%s0 + $0x4a0] sm:$0xff]
  %v163 = vld [vmem:[%s0 + $0x4a8] sm:$0xff]
  %v164 = vld [vmem:[%s0 + $0x4b0] sm:$0xff]
  %v165 = vld [vmem:[%s0 + $0x4b8] sm:$0xff]
  %v166 = vld [vmem:[%s0 + $0x4c0] sm:$0xff]
  %v167 = vld [vmem:[%s0 + $0x4c8] sm:$0xff]
  %v168 = vld [vmem:[%s0 + $0x4d0] sm:$0xff]
  %v169 = vld [vmem:[%s0 + $0x4d8] sm:$0xff]
  %v170 = vld [vmem:[%s0 + $0x4e0] sm:$0xff]
  %v171 = vld [vmem:[%s0 + $0x4e8] sm:$0xff]
  %v172 = vld [vmem:[%s0 + $0x4f0] sm:$0xff]
  %v173 = vld [vmem:[%s0 + $0x4f8] sm:$0xff]
  %v174 = vld [vmem:[%s0 + $0x500] sm:$0xff]
  %v175 = vld [vmem:[%s0 + $0x508] sm:$0xff]
  %v176 = vld [vmem:[%s0 + $0x510] sm:$0xff]
  %v177 = vld [vmem:[%s0 + $0x518] sm:$0xff]
  %v178 = vld [vmem:[%s0 + $0x520] sm:$0xff]
  %v179 = vld [vmem:[%s0 + $0x528] sm:$0xff]
  %v180 = vld [vmem:[%s0 + $0x530] sm:$0xff]
  %v181 = vld [vmem:[%s0 + $0x538] sm:$0xff]
  %v182 = vld [vmem:[%s0 + $0x540] sm:$0xff]
  %v183 = vld [vmem:[%s0 + $0x548] sm:$0xff]
  %v184 = vld [vmem:[%s0 + $0x550] sm:$0xff]
  %v185 = vld [vmem:[%s0 + $0x558] sm:$0xff]
  %v186 = vld [vmem:[%s0 + $0x560] sm:$0xff]
  %v187 = vld [vmem:[%s0 + $0x568] sm:$0xff]
  %v188 = vld [vmem:[%s0 + $0x570] sm:$0xff]
  %v189 = vld [vmem:[%s0 + $0x578] sm:$0xff]
  %v190 = vld [vmem:[%s0 + $0x580] sm:$0xff]
  %v191 = vld [vmem:[%s0 + $0x588] sm:$0xff]
  %v192 = vld [vmem:[%s0 + $0x590] sm:$0xff]
  %v193 = vld [vmem:[%s0 + $0x598] sm:$0xff]
  %v194 = vld [vmem:[%s0 + $0x5a0] sm:$0xff]
  %v195 = vld [vmem:[%s0 + $0x5a8] sm:$0xff]
  %v196 = vld [vmem:[%s0 + $0x5b0] sm:$0xff]
  %v197 = vld [vmem:[%s0 + $0x5b8] sm:$0xff]
  %v198 = vld [vmem:[%s0 + $0x5c0] sm:$0xff]
  %v199 = vld [vmem:[%s0 + $0x5c8] sm:$0xff]
  %v200 = vld [vmem:[%s0 + $0x5d0] sm:$0xff]
  %v201 = vld [vmem:[%s0 + $0x5d8] sm:$0xff]
  %v202 = vld [vmem:[%s0 + $0x5e0] sm:$0xff]
  %v203 = vld [vmem:[%s0 + $0x5e8] sm:$0xff]
  %v204 = vld [vmem:[%s0 + $0x5f0] sm:$0xff]
  %v205 = vld [vmem:[%s0 + $0x5f8] sm:$0xff]
  %v206 = vld [vmem:[%s0 + $0x600] sm:$0xff]
  %v207 = vld [vmem:[%s0 + $0x608] sm:$0xff]
  %v208 = vld [vmem:[%s0 + $0x610] sm:$0xff]
  %v209 = vld [vmem:[%s0 + $0x618] sm:$0xff]
  %v210 = vld [vmem:[%s0 + $0x620] sm:$0xff]
  %v211 = vld [vmem:[%s0 + $0x628] sm:$0xff]
  %v212 = vld [vmem:[%s0 + $0x630] sm:$0xff]
  %v213 = vld [vmem:[%s0 + $0x638] sm:$0xff]
  %v214 = vld [vmem:[%s0 + $0x640] sm:$0xff]
  %v215 = vld [vmem:[%s0 + $0x648] sm:$0xff]
  %v216 = vld [vmem:[%s0 + $0x650] sm:$0xff]
  %v217 = vld [vmem:[%s0 + $0x658] sm:$0xff]
  %v218 = vld [vmem:[%s0 + $0x660] sm:$0xff]
  %v219 = vld [vmem:[%s0 + $0x668] sm:$0xff]
  %v220 = vld [vmem:[%s0 + $0x670] sm:$0xff]
  %v221 = vld [vmem:[%s0 + $0x678] sm:$0xff]
  %v222 = vld [vmem:[%s0 + $0x680] sm:$0xff]
  %v223 = vld [vmem:[%s0 + $0x688] sm:$0xff]
  %v224 = vld [vmem:[%s0 + $0x690] sm:$0xff]
  %v225 = vld [vmem:[%s0 + $0x698] sm:$0xff]
  %v226 = vld [vmem:[%s0 + $0x6a0] sm:$0xff]
  %v227 = vld [vmem:[%s0 + $0x6a8] sm:$0xff]
  %v228 = vld [vmem:[%s0 + $0x6b0] sm:$0xff]
  %v229 = vld [vmem:[%s0 + $0x6b8] sm:$0xff]
  %v230 = vld [vmem:[%s0 + $0x6c0] sm:$0xff]
  %v231 = vld [vmem:[%s0 + $0x6c8] sm:$0xff]
  %v232 = vld [vmem:[%s0 + $0x6d0] sm:$0xff]
  %v233 = vld [vmem:[%s0 + $0x6d8] sm:$0xff]
  %v234 = vld [vmem:[%s0 + $0x6e0] sm:$0xff]
  %v235 = vld [vmem:[%s0 + $0x6e8] sm:$0xff]
  %v236 = vld [vmem:[%s0 + $0x6f0] sm:$0xff]
  %v237 = vld [vmem:[%s0 + $0x6f8] sm:$0xff]
  %v238 = vld [vmem:[%s0 + $0x700] sm:$0xff]
  %v239 = vld [vmem:[%s0 + $0x708] sm:$0xff]
  %v240 = vld [vmem:[%s0 + $0x710] sm:$0xff]
  %v241 = vld [vmem:[%s0 + $0x718] sm:$0xff]
  %v242 = vld [vmem:[%s0 + $0x720] sm:$0xff]
  %v243 = vld [vmem:[%s0 + $0x728] sm:$0xff]
  %v244 = vld [vmem:[%s0 + $0x730] sm:$0xff]
  %v245 = vld [vmem:[%s0 + $0x738] sm:$0xff]
  %v246 = vld [vmem:[%s0 + $0x740] sm:$0xff]
  %v247 = vld [vmem:[%s0 + $0x748] sm:$0xff]
  %v248 = vld [vmem:[%s0 + $0x750] sm:$0xff]
  %v249 = vld [vmem:[%s0 + $0x758] sm:$0xff]
  %v250 = vld [vmem:[%s0 + $0x760] sm:$0xff]
  %v251 = vld [vmem:[%s0 + $0x768] sm:$0xff]
  %v252 = vld [vmem:[%s0 + $0x770] sm:$0xff]
  %v253 = vld [vmem:[%s0 + $0x778] sm:$0xff]
  %v254 = vld [vmem:[%s0 + $0x780] sm:$0xff]
  %v255 = vld [vmem:[%s0 + $0x788] sm:$0xff]
  %v256 = vld [vmem:[%s0 + $0x790] sm:$0xff]
  %v257 = vld [vmem:[%s0 + $0x798] sm:$0xff]
  %v258 = vld [vmem:[%s0 + $0x7a0] sm:$0xff]
  %v259 = vld [vmem:[%s0 + $0x7a8] sm:$0xff]
  %v260 = vld [vmem:[%s0 + $0x7b0] sm:$0xff]
  %v261 = vld [vmem:[%s0 + $0x7b8] sm:$0xff]
  %v262 = vld [vmem:[%s0 + $0x7c0] sm:$0xff]
  %v263 = vld [vmem:[%s0 + $0x7c8] sm:$0xff]
  %v264 = vld [vmem:[%s0 + $0x7d0] sm:$0xff]
  %v265 = vld [vmem:[%s0 + $0x7d8] sm:$0xff]
  %v266 = vld [vmem:[%s0 + $0x7e0] sm:$0xff]
  %v267 = vld [vmem:[%s0 + $0x7e8] sm:$0xff]
  %v268 = vld [vmem:[%s0 + $0x7f0] sm:$0xff]
  %v269 = vld [vmem:[%s0 + $0x7f8] sm:$0xff]
  %vm270 = vcmask 31744
  %v271 = vsel %vm270, %v14, 0.0
  %v272 = vsel %vm270, %v15, 0.0
  %v273 = vadd.f32 %v271, %v272
  %v274 = vsel %vm270, %v16, 0.0
  %v275 = vadd.f32 %v273, %v274
  %v276 = vsel %vm270, %v17, 0.0
  %v277 = vadd.f32 %v275, %v276
  %v278 = vsel %vm270, %v18, 0.0
  %v279 = vadd.f32 %v277, %v278
  %v280 = vsel %vm270, %v19, 0.0
  %v281 = vadd.f32 %v279, %v280
  %v282 = vsel %vm270, %v20, 0.0
  %v283 = vadd.f32 %v281, %v282
  %v284 = vsel %vm270, %v21, 0.0
  %v285 = vadd.f32 %v283, %v284
  %v286 = vsel %vm270, %v22, 0.0
  %v287 = vadd.f32 %v285, %v286
  %v288 = vsel %vm270, %v23, 0.0
  %v289 = vadd.f32 %v287, %v288
  %v290 = vsel %vm270, %v24, 0.0
  %v291 = vadd.f32 %v289, %v290
  %v292 = vsel %vm270, %v25, 0.0
  %v293 = vadd.f32 %v291, %v292
  %v294 = vsel %vm270, %v26, 0.0
  %v295 = vadd.f32 %v293, %v294
  %v296 = vsel %vm270, %v27, 0.0
  %v297 = vadd.f32 %v295, %v296
  %v298 = vsel %vm270, %v28, 0.0
  %v299 = vadd.f32 %v297, %v298
  %v300 = vsel %vm270, %v29, 0.0
  %v301 = vadd.f32 %v299, %v300
  %v302 = vsel %vm270, %v30, 0.0
  %v303 = vadd.f32 %v301, %v302
  %v304 = vsel %vm270, %v31, 0.0
  %v305 = vadd.f32 %v303, %v304
  %v306 = vsel %vm270, %v32, 0.0
  %v307 = vadd.f32 %v305, %v306
  %v308 = vsel %vm270, %v33, 0.0
  %v309 = vadd.f32 %v307, %v308
  %v310 = vsel %vm270, %v34, 0.0
  %v311 = vadd.f32 %v309, %v310
  %v312 = vsel %vm270, %v35, 0.0
  %v313 = vadd.f32 %v311, %v312
  %v314 = vsel %vm270, %v36, 0.0
  %v315 = vadd.f32 %v313, %v314
  %v316 = vsel %vm270, %v37, 0.0
  %v317 = vadd.f32 %v315, %v316
  %v318 = vsel %vm270, %v38, 0.0
  %v319 = vadd.f32 %v317, %v318
  %v320 = vsel %vm270, %v39, 0.0
  %v321 = vadd.f32 %v319, %v320
  %v322 = vsel %vm270, %v40, 0.0
  %v323 = vadd.f32 %v321, %v322
  %v324 = vsel %vm270, %v41, 0.0
  %v325 = vadd.f32 %v323, %v324
  %v326 = vsel %vm270, %v42, 0.0
  %v327 = vadd.f32 %v325, %v326
  %v328 = vsel %vm270, %v43, 0.0
  %v329 = vadd.f32 %v327, %v328
  %v330 = vsel %vm270, %v44, 0.0
  %v331 = vadd.f32 %v329, %v330
  %v332 = vsel %vm270, %v45, 0.0
  %v333 = vadd.f32 %v331, %v332
  %v334 = vrot.slane %v333, 4
  %v335 = vadd.f32 %v333, %v334
  %v336 = vrot.slane %v335, 2
  %v337 = vadd.f32 %v335, %v336
  %v338 = vrot.slane %v337, 1
  %v339 = vadd.f32 %v337, %v338
  %v340 = vsel %vm270, %v46, 0.0
  %v341 = vsel %vm270, %v47, 0.0
  %v342 = vadd.f32 %v340, %v341
  %v343 = vsel %vm270, %v48, 0.0
  %v344 = vadd.f32 %v342, %v343
  %v345 = vsel %vm270, %v49, 0.0
  %v346 = vadd.f32 %v344, %v345
  %v347 = vsel %vm270, %v50, 0.0
  %v348 = vadd.f32 %v346, %v347
  %v349 = vsel %vm270, %v51, 0.0
  %v350 = vadd.f32 %v348, %v349
  %v351 = vsel %vm270, %v52, 0.0
  %v352 = vadd.f32 %v350, %v351
  %v353 = vsel %vm270, %v53, 0.0
  %v354 = vadd.f32 %v352, %v353
  %v355 = vsel %vm270, %v54, 0.0
  %v356 = vadd.f32 %v354, %v355
  %v357 = vsel %vm270, %v55, 0.0
  %v358 = vadd.f32 %v356, %v357
  %v359 = vsel %vm270, %v56, 0.0
  %v360 = vadd.f32 %v358, %v359
  %v361 = vsel %vm270, %v57, 0.0
  %v362 = vadd.f32 %v360, %v361
  %v363 = vsel %vm270, %v58, 0.0
  %v364 = vadd.f32 %v362, %v363
  %v365 = vsel %vm270, %v59, 0.0
  %v366 = vadd.f32 %v364, %v365
  %v367 = vsel %vm270, %v60, 0.0
  %v368 = vadd.f32 %v366, %v367
  %v369 = vsel %vm270, %v61, 0.0
  %v370 = vadd.f32 %v368, %v369
  %v371 = vsel %vm270, %v62, 0.0
  %v372 = vadd.f32 %v370, %v371
  %v373 = vsel %vm270, %v63, 0.0
  %v374 = vadd.f32 %v372, %v373
  %v375 = vsel %vm270, %v64, 0.0
  %v376 = vadd.f32 %v374, %v375
  %v377 = vsel %vm270, %v65, 0.0
  %v378 = vadd.f32 %v376, %v377
  %v379 = vsel %vm270, %v66, 0.0
  %v380 = vadd.f32 %v378, %v379
  %v381 = vsel %vm270, %v67, 0.0
  %v382 = vadd.f32 %v380, %v381
  %v383 = vsel %vm270, %v68, 0.0
  %v384 = vadd.f32 %v382, %v383
  %v385 = vsel %vm270, %v69, 0.0
  %v386 = vadd.f32 %v384, %v385
  %v387 = vsel %vm270, %v70, 0.0
  %v388 = vadd.f32 %v386, %v387
  %v389 = vsel %vm270, %v71, 0.0
  %v390 = vadd.f32 %v388, %v389
  %v391 = vsel %vm270, %v72, 0.0
  %v392 = vadd.f32 %v390, %v391
  %v393 = vsel %vm270, %v73, 0.0
  %v394 = vadd.f32 %v392, %v393
  %v395 = vsel %vm270, %v74, 0.0
  %v396 = vadd.f32 %v394, %v395
  %v397 = vsel %vm270, %v75, 0.0
  %v398 = vadd.f32 %v396, %v397
  %v399 = vsel %vm270, %v76, 0.0
  %v400 = vadd.f32 %v398, %v399
  %v401 = vsel %vm270, %v77, 0.0
  %v402 = vadd.f32 %v400, %v401
  %v403 = vrot.slane %v402, 4
  %v404 = vadd.f32 %v402, %v403
  %v405 = vrot.slane %v404, 2
  %v406 = vadd.f32 %v404, %v405
  %v407 = vrot.slane %v406, 1
  %v408 = vadd.f32 %v406, %v407
  %v409 = vsel %vm270, %v78, 0.0
  %v410 = vsel %vm270, %v79, 0.0
  %v411 = vadd.f32 %v409, %v410
  %v412 = vsel %vm270, %v80, 0.0
  %v413 = vadd.f32 %v411, %v412
  %v414 = vsel %vm270, %v81, 0.0
  %v415 = vadd.f32 %v413, %v414
  %v416 = vsel %vm270, %v82, 0.0
  %v417 = vadd.f32 %v415, %v416
  %v418 = vsel %vm270, %v83, 0.0
  %v419 = vadd.f32 %v417, %v418
  %v420 = vsel %vm270, %v84, 0.0
  %v421 = vadd.f32 %v419, %v420
  %v422 = vsel %vm270, %v85, 0.0
  %v423 = vadd.f32 %v421, %v422
  %v424 = vsel %vm270, %v86, 0.0
  %v425 = vadd.f32 %v423, %v424
  %v426 = vsel %vm270, %v87, 0.0
  %v427 = vadd.f32 %v425, %v426
  %v428 = vsel %vm270, %v88, 0.0
  %v429 = vadd.f32 %v427, %v428
  %v430 = vsel %vm270, %v89, 0.0
  %v431 = vadd.f32 %v429, %v430
  %v432 = vsel %vm270, %v90, 0.0
  %v433 = vadd.f32 %v431, %v432
  %v434 = vsel %vm270, %v91, 0.0
  %v435 = vadd.f32 %v433, %v434
  %v436 = vsel %vm270, %v92, 0.0
  %v437 = vadd.f32 %v435, %v436
  %v438 = vsel %vm270, %v93, 0.0
  %v439 = vadd.f32 %v437, %v438
  %v440 = vsel %vm270, %v94, 0.0
  %v441 = vadd.f32 %v439, %v440
  %v442 = vsel %vm270, %v95, 0.0
  %v443 = vadd.f32 %v441, %v442
  %v444 = vsel %vm270, %v96, 0.0
  %v445 = vadd.f32 %v443, %v444
  %v446 = vsel %vm270, %v97, 0.0
  %v447 = vadd.f32 %v445, %v446
  %v448 = vsel %vm270, %v98, 0.0
  %v449 = vadd.f32 %v447, %v448
  %v450 = vsel %vm270, %v99, 0.0
  %v451 = vadd.f32 %v449, %v450
  %v452 = vsel %vm270, %v100, 0.0
  %v453 = vadd.f32 %v451, %v452
  %v454 = vsel %vm270, %v101, 0.0
  %v455 = vadd.f32 %v453, %v454
  %v456 = vsel %vm270, %v102, 0.0
  %v457 = vadd.f32 %v455, %v456
  %v458 = vsel %vm270, %v103, 0.0
  %v459 = vadd.f32 %v457, %v458
  %v460 = vsel %vm270, %v104, 0.0
  %v461 = vadd.f32 %v459, %v460
  %v462 = vsel %vm270, %v105, 0.0
  %v463 = vadd.f32 %v461, %v462
  %v464 = vsel %vm270, %v106, 0.0
  %v465 = vadd.f32 %v463, %v464
  %v466 = vsel %vm270, %v107, 0.0
  %v467 = vadd.f32 %v465, %v466
  %v468 = vsel %vm270, %v108, 0.0
  %v469 = vadd.f32 %v467, %v468
  %v470 = vsel %vm270, %v109, 0.0
  %v471 = vadd.f32 %v469, %v470
  %v472 = vrot.slane %v471, 4
  %v473 = vadd.f32 %v471, %v472
  %v474 = vrot.slane %v473, 2
  %v475 = vadd.f32 %v473, %v474
  %v476 = vrot.slane %v475, 1
  %v477 = vadd.f32 %v475, %v476
  %v478 = vsel %vm270, %v110, 0.0
  %v479 = vsel %vm270, %v111, 0.0
  %v480 = vadd.f32 %v478, %v479
  %v481 = vsel %vm270, %v112, 0.0
  %v482 = vadd.f32 %v480, %v481
  %v483 = vsel %vm270, %v113, 0.0
  %v484 = vadd.f32 %v482, %v483
  %v485 = vsel %vm270, %v114, 0.0
  %v486 = vadd.f32 %v484, %v485
  %v487 = vsel %vm270, %v115, 0.0
  %v488 = vadd.f32 %v486, %v487
  %v489 = vsel %vm270, %v116, 0.0
  %v490 = vadd.f32 %v488, %v489
  %v491 = vsel %vm270, %v117, 0.0
  %v492 = vadd.f32 %v490, %v491
  %v493 = vsel %vm270, %v118, 0.0
  %v494 = vadd.f32 %v492, %v493
  %v495 = vsel %vm270, %v119, 0.0
  %v496 = vadd.f32 %v494, %v495
  %v497 = vsel %vm270, %v120, 0.0
  %v498 = vadd.f32 %v496, %v497
  %v499 = vsel %vm270, %v121, 0.0
  %v500 = vadd.f32 %v498, %v499
  %v501 = vsel %vm270, %v122, 0.0
  %v502 = vadd.f32 %v500, %v501
  %v503 = vsel %vm270, %v123, 0.0
  %v504 = vadd.f32 %v502, %v503
  %v505 = vsel %vm270, %v124, 0.0
  %v506 = vadd.f32 %v504, %v505
  %v507 = vsel %vm270, %v125, 0.0
  %v508 = vadd.f32 %v506, %v507
  %v509 = vsel %vm270, %v126, 0.0
  %v510 = vadd.f32 %v508, %v509
  %v511 = vsel %vm270, %v127, 0.0
  %v512 = vadd.f32 %v510, %v511
  %v513 = vsel %vm270, %v128, 0.0
  %v514 = vadd.f32 %v512, %v513
  %v515 = vsel %vm270, %v129, 0.0
  %v516 = vadd.f32 %v514, %v515
  %v517 = vsel %vm270, %v130, 0.0
  %v518 = vadd.f32 %v516, %v517
  %v519 = vsel %vm270, %v131, 0.0
  %v520 = vadd.f32 %v518, %v519
  %v521 = vsel %vm270, %v132, 0.0
  %v522 = vadd.f32 %v520, %v521
  %v523 = vsel %vm270, %v133, 0.0
  %v524 = vadd.f32 %v522, %v523
  %v525 = vsel %vm270, %v134, 0.0
  %v526 = vadd.f32 %v524, %v525
  %v527 = vsel %vm270, %v135, 0.0
  %v528 = vadd.f32 %v526, %v527
  %v529 = vsel %vm270, %v136, 0.0
  %v530 = vadd.f32 %v528, %v529
  %v531 = vsel %vm270, %v137, 0.0
  %v532 = vadd.f32 %v530, %v531
  %v533 = vsel %vm270, %v138, 0.0
  %v534 = vadd.f32 %v532, %v533
  %v535 = vsel %vm270, %v139, 0.0
  %v536 = vadd.f32 %v534, %v535
  %v537 = vsel %vm270, %v140, 0.0
  %v538 = vadd.f32 %v536, %v537
  %v539 = vsel %vm270, %v141, 0.0
  %v540 = vadd.f32 %v538, %v539
  %v541 = vrot.slane %v540, 4
  %v542 = vadd.f32 %v540, %v541
  %v543 = vrot.slane %v542, 2
  %v544 = vadd.f32 %v542, %v543
  %v545 = vrot.slane %v544, 1
  %v546 = vadd.f32 %v544, %v545
  %v547 = vsel %vm270, %v142, 0.0
  %v548 = vsel %vm270, %v143, 0.0
  %v549 = vadd.f32 %v547, %v548
  %v550 = vsel %vm270, %v144, 0.0
  %v551 = vadd.f32 %v549, %v550
  %v552 = vsel %vm270, %v145, 0.0
  %v553 = vadd.f32 %v551, %v552
  %v554 = vsel %vm270, %v146, 0.0
  %v555 = vadd.f32 %v553, %v554
  %v556 = vsel %vm270, %v147, 0.0
  %v557 = vadd.f32 %v555, %v556
  %v558 = vsel %vm270, %v148, 0.0
  %v559 = vadd.f32 %v557, %v558
  %v560 = vsel %vm270, %v149, 0.0
  %v561 = vadd.f32 %v559, %v560
  %v562 = vsel %vm270, %v150, 0.0
  %v563 = vadd.f32 %v561, %v562
  %v564 = vsel %vm270, %v151, 0.0
  %v565 = vadd.f32 %v563, %v564
  %v566 = vsel %vm270, %v152, 0.0
  %v567 = vadd.f32 %v565, %v566
  %v568 = vsel %vm270, %v153, 0.0
  %v569 = vadd.f32 %v567, %v568
  %v570 = vsel %vm270, %v154, 0.0
  %v571 = vadd.f32 %v569, %v570
  %v572 = vsel %vm270, %v155, 0.0
  %v573 = vadd.f32 %v571, %v572
  %v574 = vsel %vm270, %v156, 0.0
  %v575 = vadd.f32 %v573, %v574
  %v576 = vsel %vm270, %v157, 0.0
  %v577 = vadd.f32 %v575, %v576
  %v578 = vsel %vm270, %v158, 0.0
  %v579 = vadd.f32 %v577, %v578
  %v580 = vsel %vm270, %v159, 0.0
  %v581 = vadd.f32 %v579, %v580
  %v582 = vsel %vm270, %v160, 0.0
  %v583 = vadd.f32 %v581, %v582
  %v584 = vsel %vm270, %v161, 0.0
  %v585 = vadd.f32 %v583, %v584
  %v586 = vsel %vm270, %v162, 0.0
  %v587 = vadd.f32 %v585, %v586
  %v588 = vsel %vm270, %v163, 0.0
  %v589 = vadd.f32 %v587, %v588
  %v590 = vsel %vm270, %v164, 0.0
  %v591 = vadd.f32 %v589, %v590
  %v592 = vsel %vm270, %v165, 0.0
  %v593 = vadd.f32 %v591, %v592
  %v594 = vsel %vm270, %v166, 0.0
  %v595 = vadd.f32 %v593, %v594
  %v596 = vsel %vm270, %v167, 0.0
  %v597 = vadd.f32 %v595, %v596
  %v598 = vsel %vm270, %v168, 0.0
  %v599 = vadd.f32 %v597, %v598
  %v600 = vsel %vm270, %v169, 0.0
  %v601 = vadd.f32 %v599, %v600
  %v602 = vsel %vm270, %v170, 0.0
  %v603 = vadd.f32 %v601, %v602
  %v604 = vsel %vm270, %v171, 0.0
  %v605 = vadd.f32 %v603, %v604
  %v606 = vsel %vm270, %v172, 0.0
  %v607 = vadd.f32 %v605, %v606
  %v608 = vsel %vm270, %v173, 0.0
  %v609 = vadd.f32 %v607, %v608
  %v610 = vrot.slane %v609, 4
  %v611 = vadd.f32 %v609, %v610
  %v612 = vrot.slane %v611, 2
  %v613 = vadd.f32 %v611, %v612
  %v614 = vrot.slane %v613, 1
  %v615 = vadd.f32 %v613, %v614
  %v616 = vsel %vm270, %v174, 0.0
  %v617 = vsel %vm270, %v175, 0.0
  %v618 = vadd.f32 %v616, %v617
  %v619 = vsel %vm270, %v176, 0.0
  %v620 = vadd.f32 %v618, %v619
  %v621 = vsel %vm270, %v177, 0.0
  %v622 = vadd.f32 %v620, %v621
  %v623 = vsel %vm270, %v178, 0.0
  %v624 = vadd.f32 %v622, %v623
  %v625 = vsel %vm270, %v179, 0.0
  %v626 = vadd.f32 %v624, %v625
  %v627 = vsel %vm270, %v180, 0.0
  %v628 = vadd.f32 %v626, %v627
  %v629 = vsel %vm270, %v181, 0.0
  %v630 = vadd.f32 %v628, %v629
  %v631 = vsel %vm270, %v182, 0.0
  %v632 = vadd.f32 %v630, %v631
  %v633 = vsel %vm270, %v183, 0.0
  %v634 = vadd.f32 %v632, %v633
  %v635 = vsel %vm270, %v184, 0.0
  %v636 = vadd.f32 %v634, %v635
  %v637 = vsel %vm270, %v185, 0.0
  %v638 = vadd.f32 %v636, %v637
  %v639 = vsel %vm270, %v186, 0.0
  %v640 = vadd.f32 %v638, %v639
  %v641 = vsel %vm270, %v187, 0.0
  %v642 = vadd.f32 %v640, %v641
  %v643 = vsel %vm270, %v188, 0.0
  %v644 = vadd.f32 %v642, %v643
  %v645 = vsel %vm270, %v189, 0.0
  %v646 = vadd.f32 %v644, %v645
  %v647 = vsel %vm270, %v190, 0.0
  %v648 = vadd.f32 %v646, %v647
  %v649 = vsel %vm270, %v191, 0.0
  %v650 = vadd.f32 %v648, %v649
  %v651 = vsel %vm270, %v192, 0.0
  %v652 = vadd.f32 %v650, %v651
  %v653 = vsel %vm270, %v193, 0.0
  %v654 = vadd.f32 %v652, %v653
  %v655 = vsel %vm270, %v194, 0.0
  %v656 = vadd.f32 %v654, %v655
  %v657 = vsel %vm270, %v195, 0.0
  %v658 = vadd.f32 %v656, %v657
  %v659 = vsel %vm270, %v196, 0.0
  %v660 = vadd.f32 %v658, %v659
  %v661 = vsel %vm270, %v197, 0.0
  %v662 = vadd.f32 %v660, %v661
  %v663 = vsel %vm270, %v198, 0.0
  %v664 = vadd.f32 %v662, %v663
  %v665 = vsel %vm270, %v199, 0.0
  %v666 = vadd.f32 %v664, %v665
  %v667 = vsel %vm270, %v200, 0.0
  %v668 = vadd.f32 %v666, %v667
  %v669 = vsel %vm270, %v201, 0.0
  %v670 = vadd.f32 %v668, %v669
  %v671 = vsel %vm270, %v202, 0.0
  %v672 = vadd.f32 %v670, %v671
  %v673 = vsel %vm270, %v203, 0.0
  %v674 = vadd.f32 %v672, %v673
  %v675 = vsel %vm270, %v204, 0.0
  %v676 = vadd.f32 %v674, %v675
  %v677 = vsel %vm270, %v205, 0.0
  %v678 = vadd.f32 %v676, %v677
  %v679 = vrot.slane %v678, 4
  %v680 = vadd.f32 %v678, %v679
  %v681 = vrot.slane %v680, 2
  %v682 = vadd.f32 %v680, %v681
  %v683 = vrot.slane %v682, 1
  %v684 = vadd.f32 %v682, %v683
  %v685 = vsel %vm270, %v206, 0.0
  %v686 = vsel %vm270, %v207, 0.0
  %v687 = vadd.f32 %v685, %v686
  %v688 = vsel %vm270, %v208, 0.0
  %v689 = vadd.f32 %v687, %v688
  %v690 = vsel %vm270, %v209, 0.0
  %v691 = vadd.f32 %v689, %v690
  %v692 = vsel %vm270, %v210, 0.0
  %v693 = vadd.f32 %v691, %v692
  %v694 = vsel %vm270, %v211, 0.0
  %v695 = vadd.f32 %v693, %v694
  %v696 = vsel %vm270, %v212, 0.0
  %v697 = vadd.f32 %v695, %v696
  %v698 = vsel %vm270, %v213, 0.0
  %v699 = vadd.f32 %v697, %v698
  %v700 = vsel %vm270, %v214, 0.0
  %v701 = vadd.f32 %v699, %v700
  %v702 = vsel %vm270, %v215, 0.0
  %v703 = vadd.f32 %v701, %v702
  %v704 = vsel %vm270, %v216, 0.0
  %v705 = vadd.f32 %v703, %v704
  %v706 = vsel %vm270, %v217, 0.0
  %v707 = vadd.f32 %v705, %v706
  %v708 = vsel %vm270, %v218, 0.0
  %v709 = vadd.f32 %v707, %v708
  %v710 = vsel %vm270, %v219, 0.0
  %v711 = vadd.f32 %v709, %v710
  %v712 = vsel %vm270, %v220, 0.0
  %v713 = vadd.f32 %v711, %v712
  %v714 = vsel %vm270, %v221, 0.0
  %v715 = vadd.f32 %v713, %v714
  %v716 = vsel %vm270, %v222, 0.0
  %v717 = vadd.f32 %v715, %v716
  %v718 = vsel %vm270, %v223, 0.0
  %v719 = vadd.f32 %v717, %v718
  %v720 = vsel %vm270, %v224, 0.0
  %v721 = vadd.f32 %v719, %v720
  %v722 = vsel %vm270, %v225, 0.0
  %v723 = vadd.f32 %v721, %v722
  %v724 = vsel %vm270, %v226, 0.0
  %v725 = vadd.f32 %v723, %v724
  %v726 = vsel %vm270, %v227, 0.0
  %v727 = vadd.f32 %v725, %v726
  %v728 = vsel %vm270, %v228, 0.0
  %v729 = vadd.f32 %v727, %v728
  %v730 = vsel %vm270, %v229, 0.0
  %v731 = vadd.f32 %v729, %v730
  %v732 = vsel %vm270, %v230, 0.0
  %v733 = vadd.f32 %v731, %v732
  %v734 = vsel %vm270, %v231, 0.0
  %v735 = vadd.f32 %v733, %v734
  %v736 = vsel %vm270, %v232, 0.0
  %v737 = vadd.f32 %v735, %v736
  %v738 = vsel %vm270, %v233, 0.0
  %v739 = vadd.f32 %v737, %v738
  %v740 = vsel %vm270, %v234, 0.0
  %v741 = vadd.f32 %v739, %v740
  %v742 = vsel %vm270, %v235, 0.0
  %v743 = vadd.f32 %v741, %v742
  %v744 = vsel %vm270, %v236, 0.0
  %v745 = vadd.f32 %v743, %v744
  %v746 = vsel %vm270, %v237, 0.0
  %v747 = vadd.f32 %v745, %v746
  %v748 = vrot.slane %v747, 4
  %v749 = vadd.f32 %v747, %v748
  %v750 = vrot.slane %v749, 2
  %v751 = vadd.f32 %v749, %v750
  %v752 = vrot.slane %v751, 1
  %v753 = vadd.f32 %v751, %v752
  %v754 = vsel %vm270, %v238, 0.0
  %v755 = vsel %vm270, %v239, 0.0
  %v756 = vadd.f32 %v754, %v755
  %v757 = vsel %vm270, %v240, 0.0
  %v758 = vadd.f32 %v756, %v757
  %v759 = vsel %vm270, %v241, 0.0
  %v760 = vadd.f32 %v758, %v759
  %v761 = vsel %vm270, %v242, 0.0
  %v762 = vadd.f32 %v760, %v761
  %v763 = vsel %vm270, %v243, 0.0
  %v764 = vadd.f32 %v762, %v763
  %v765 = vsel %vm270, %v244, 0.0
  %v766 = vadd.f32 %v764, %v765
  %v767 = vsel %vm270, %v245, 0.0
  %v768 = vadd.f32 %v766, %v767
  %v769 = vsel %vm270, %v246, 0.0
  %v770 = vadd.f32 %v768, %v769
  %v771 = vsel %vm270, %v247, 0.0
  %v772 = vadd.f32 %v770, %v771
  %v773 = vsel %vm270, %v248, 0.0
  %v774 = vadd.f32 %v772, %v773
  %v775 = vsel %vm270, %v249, 0.0
  %v776 = vadd.f32 %v774, %v775
  %v777 = vsel %vm270, %v250, 0.0
  %v778 = vadd.f32 %v776, %v777
  %v779 = vsel %vm270, %v251, 0.0
  %v780 = vadd.f32 %v778, %v779
  %v781 = vsel %vm270, %v252, 0.0
  %v782 = vadd.f32 %v780, %v781
  %v783 = vsel %vm270, %v253, 0.0
  %v784 = vadd.f32 %v782, %v783
  %v785 = vsel %vm270, %v254, 0.0
  %v786 = vadd.f32 %v784, %v785
  %v787 = vsel %vm270, %v255, 0.0
  %v788 = vadd.f32 %v786, %v787
  %v789 = vsel %vm270, %v256, 0.0
  %v790 = vadd.f32 %v788, %v789
  %v791 = vsel %vm270, %v257, 0.0
  %v792 = vadd.f32 %v790, %v791
  %v793 = vsel %vm270, %v258, 0.0
  %v794 = vadd.f32 %v792, %v793
  %v795 = vsel %vm270, %v259, 0.0
  %v796 = vadd.f32 %v794, %v795
  %v797 = vsel %vm270, %v260, 0.0
  %v798 = vadd.f32 %v796, %v797
  %v799 = vsel %vm270, %v261, 0.0
  %v800 = vadd.f32 %v798, %v799
  %v801 = vsel %vm270, %v262, 0.0
  %v802 = vadd.f32 %v800, %v801
  %v803 = vsel %vm270, %v263, 0.0
  %v804 = vadd.f32 %v802, %v803
  %v805 = vsel %vm270, %v264, 0.0
  %v806 = vadd.f32 %v804, %v805
  %v807 = vsel %vm270, %v265, 0.0
  %v808 = vadd.f32 %v806, %v807
  %v809 = vsel %vm270, %v266, 0.0
  %v810 = vadd.f32 %v808, %v809
  %v811 = vsel %vm270, %v267, 0.0
  %v812 = vadd.f32 %v810, %v811
  %v813 = vsel %vm270, %v268, 0.0
  %v814 = vadd.f32 %v812, %v813
  %v815 = vsel %vm270, %v269, 0.0
  %v816 = vadd.f32 %v814, %v815
  %v817 = vrot.slane %v816, 4
  %v818 = vadd.f32 %v816, %v817
  %v819 = vrot.slane %v818, 2
  %v820 = vadd.f32 %v818, %v819
  %v821 = vrot.slane %v820, 1
  %v822 = vadd.f32 %v820, %v821
  %v823 = vmul.f32 %v339, 0.00390625
  %v824 = vmul.f32 %v408, 0.00390625
  %v825 = vmul.f32 %v477, 0.00390625
  %v826 = vmul.f32 %v546, 0.00390625
  %v827 = vmul.f32 %v615, 0.00390625
  %v828 = vmul.f32 %v684, 0.00390625
  %v829 = vmul.f32 %v753, 0.00390625
  %v830 = vmul.f32 %v822, 0.00390625
  %v831 = vld [vmem:[%s1] sm:$0xf]
  %v832 = vld [vmem:[%s2] sm:$0x1]
  %v834 = vlaneseq
  %v835 = vshrl.u32 %v834, 7
  %v836 = vsub.s32 0, %v835
  %v837 = vrot.slane %v832, %v836
  %vm847 = vcmask 1041409
  %v848 = vsel %vm847, %v824, %v823
  %vm849 = vcmask 1042434
  %v850 = vsel %vm849, %v825, %v848
  %vm851 = vcmask 1043459
  %v852 = vsel %vm851, %v826, %v850
  %vm853 = vcmask 1044484
  %v854 = vsel %vm853, %v827, %v852
  %vm855 = vcmask 1045509
  %v856 = vsel %vm855, %v828, %v854
  %vm857 = vcmask 1046534
  %v858 = vsel %vm857, %v829, %v856
  %vm859 = vcmask 1047559
  %v860 = vsel %vm859, %v830, %v858
  %v861 = vsel %vm270, %v860, 0
  %vm863 = vcmask 1043456
  %v865 = vsel %vm863, %v831, 0
  %867 = vmatprep.subr.mxu0 0.0
  %868 = vmatpush1.msra.mxu0 0.0
  %869 = vmatprep.subr.mxu0 0.0
  %870 = vmatpush1.msra.mxu0 0.0
  %871 = vmatprep.subr.mxu0 0.0
  %872 = vmatpush1.msra.mxu0 0.0
  %873 = vmatprep.subr.mxu0 0.0
  %874 = vmatpush1.msra.mxu0 0.0
  %875 = vmatprep.subr.mxu0 0.0
  %876 = vmatpush1.msra.mxu0 0.0
  %877 = vmatprep.subr.mxu0 0.0
  %878 = vmatpush1.msra.mxu0 0.0
  %879 = vmatprep.subr.mxu0 0.0
  %880 = vmatpush1.msra.mxu0 0.0
  %881 = vmatprep.subr.mxu0 0.0
  %882 = vmatpush1.msra.mxu0 0.0
  %883 = vmatprep.subr.mxu0 0.0
  %884 = vmatpush1.msra.mxu0 0.0
  %885 = vmatprep.subr.mxu0 0.0
  %886 = vmatpush1.msra.mxu0 0.0
  %887 = vmatprep.subr.mxu0 0.0
  %888 = vmatpush1.msra.mxu0 0.0
  %889 = vmatprep.subr.mxu0 0.0
  %890 = vmatpush1.msra.mxu0 0.0
  %891 = vmatprep.subr.mxu0 0.0
  %892 = vmatpush1.msra.mxu0 0.0
  %893 = vmatprep.subr.mxu0 0.0
  %894 = vmatpush1.msra.mxu0 0.0
  %895 = vmatprep.subr.mxu0 0.0
  %896 = vmatpush1.msra.mxu0 0.0
  %897 = vmatprep.subr.mxu0 0.0
  %898 = vmatpush1.msra.mxu0 %v865
  %899 = vmatprep.subr.mxu0 0.0
  %900 = vmatpush2.msra.mxu0 0.0
  %901 = vmatprep.subr.mxu0 0.0
  %902 = vmatpush2.msra.mxu0 0.0
  %903 = vmatprep.subr.mxu0 0.0
  %904 = vmatpush2.msra.mxu0 0.0
  %905 = vmatprep.subr.mxu0 0.0
  %906 = vmatpush2.msra.mxu0 0.0
  %907 = vmatprep.subr.mxu0 0.0
  %908 = vmatpush2.msra.mxu0 0.0
  %909 = vmatprep.subr.mxu0 0.0
  %910 = vmatpush2.msra.mxu0 0.0
  %911 = vmatprep.subr.mxu0 0.0
  %912 = vmatpush2.msra.mxu0 0.0
  %913 = vmatprep.subr.mxu0 0.0
  %914 = vmatpush2.msra.mxu0 0.0
  %915 = vmatprep.subr.mxu0 0.0
  %916 = vmatpush2.msra.mxu0 0.0
  %917 = vmatprep.subr.mxu0 0.0
  %918 = vmatpush2.msra.mxu0 0.0
  %919 = vmatprep.subr.mxu0 0.0
  %920 = vmatpush2.msra.mxu0 0.0
  %921 = vmatprep.subr.mxu0 0.0
  %922 = vmatpush2.msra.mxu0 0.0
  %923 = vmatprep.subr.mxu0 0.0
  %924 = vmatpush2.msra.mxu0 0.0
  %925 = vmatprep.subr.mxu0 0.0
  %926 = vmatpush2.msra.mxu0 0.0
  %927 = vmatprep.subr.mxu0 0.0
  %928 = vmatpush2.msra.mxu0 0.0
  %929 = vmatprep.subr.mxu0 0.0
  %930 = vmatpush2.msra.mxu0 0.0
  %931 = vmatprep.mubr.f32.mxu0 0.0
  %932 = vmatmul.mubr.f32.gmra.mxu0 %v861
  %v933 = vpop.f32.mrf.mxu0
  %v934 = vadd.f32 %v837, %v933
  %v935 = vpop.f32.mrf.mxu0
  %936 = vdwg.mxu0
  %vm937 = vcmask 326656
  %938 = vst.msk [vmem:[%s3] sm:$0xff] %vm937, %v934
  // Predicated region
  $region14: #{fast_rcnn_predictor.1} parent=0 // pred_check
    _
  $region15: #{fast_rcnn_predictor.1} parent=0 // pred_check_branch
    %940 = sbr.rel (0) target = $region17
  $region16: #{fast_rcnn_predictor.1} parent=0 // pred_region
    _
  $region17: #{fast_rcnn_predictor.1} parent=0 // pred_fallthru
    _
  // Predicated region
  $region18: #{fast_rcnn_predictor.1} parent=0 // pred_check
    _
  $region19: #{fast_rcnn_predictor.1} parent=0 // pred_check_branch
    %942 = sbr.rel (0) target = $region21
  $region20: #{fast_rcnn_predictor.1} parent=0 // pred_region
    _
  $region21: #{fast_rcnn_predictor.1} parent=0 // pred_fallthru
    _

</llo_original>
